<compile_context>
chip_gen: v6e
topology: v6e:2x2x1
jax: 0.10.0
libtpu: 0.0.40
codegen_flags: <defaults>
</compile_context>

<pallas_src>
import jax
import jax.numpy as jnp
from jax.experimental import pallas as pl
from jax.experimental.pallas import tpu as pltpu


_TARGET_BLOCK_BYTES = 4 << 20   # ~4 MiB per operand per block (review: 2-4 MiB)


def _hswish_math(xf):
    # h_swish: x * clip(x + 3, 0, 6) / 6  (== x * ReLU6(x + 3) / 6)
    return xf * jnp.clip(xf + 3.0, 0.0, 6.0) * (1.0 / 6.0)


def _hswish_ref_jnp(x):
    """Plain-jnp fallback for tiny / ragged tails."""
    xf = x if jnp.issubdtype(x.dtype, jnp.floating) else x.astype(jnp.float32)
    return _hswish_math(xf).astype(x.dtype)


def _hswish_kernel(x_ref, o_ref):
    x = x_ref[...]
    # Compute natively in the floating input dtype (bf16 stays bf16 on v6e/v7x);
    # non-float inputs upcast to f32.
    xf = x if jnp.issubdtype(x.dtype, jnp.floating) else x.astype(jnp.float32)
    o_ref[...] = _hswish_math(xf).astype(o_ref.dtype)


def _pick_lane(n):
    """Largest lane-dense width (multiple of 128) that divides n exactly."""
    for lane in (512, 256, 128):
        if n % lane == 0:
            return lane
    return None


def _pick_block_rows(rows, lane, itemsize):
    """Largest sublane-aligned divisor of `rows` with block bytes <= target,
    capped so the grid has >= 2 steps (v7x has 2 TensorCores)."""
    sub = max(8, 32 // itemsize)          # 8 for f32, 16 for bf16, 32 for int8
    if rows < 2 * sub or rows % sub != 0:
        return rows                        # single full-extent block
    max_rows = max(sub, _TARGET_BLOCK_BYTES // (lane * itemsize))
    limit = min(rows // 2, max_rows)       # keep >= 2 grid steps
    best = sub
    d = sub
    while d <= limit:
        if rows % d == 0:
            best = d
        d += sub
    return best


def _hswish_2d(x2, block_rows, inplace):
    rows, lane = x2.shape
    n = rows * lane
    itemsize = x2.dtype.itemsize
    extra = {"input_output_aliases": {0: 0}} if inplace else {}
    return pl.pallas_call(
        _hswish_kernel,
        out_shape=jax.ShapeDtypeStruct((rows, lane), x2.dtype),
        grid_spec=pltpu.PrefetchScalarGridSpec(
            num_scalar_prefetch=0,
            grid=(rows // block_rows,),
            in_specs=[pl.BlockSpec((block_rows, lane), lambda i: (i, 0))],
            out_specs=pl.BlockSpec((block_rows, lane), lambda i: (i, 0)),
        ),
        compiler_params=pltpu.CompilerParams(
            dimension_semantics=("parallel",),
            # Modest limit matching actual usage (<= ~16 MiB double-buffered);
            # leaves headroom on v7x's 64 MiB physical VMEM.
            vmem_limit_bytes=32 << 20,
        ),
        cost_estimate=pl.CostEstimate(
            flops=4 * n, transcendentals=0, bytes_accessed=2 * n * itemsize),
        **extra,
    )(x2)


def h_swish(x, inplace=False):
    """Elementwise h_swish on an arbitrarily-shaped array via a tiled Pallas kernel."""
    x = jnp.asarray(x)
    shape = x.shape
    n = int(x.size)
    if n == 0:
        return x

    lane = _pick_lane(n)
    if lane is None:
        # Ragged size: no pad/slice round-trip. Run the kernel on the
        # 128-aligned prefix and finish the (<128-element) tail in plain jnp.
        flat = x.reshape(-1)
        n_main = (n // 128) * 128
        if n_main == 0:
            return _hswish_ref_jnp(x)
        head = h_swish(flat[:n_main])
        tail = _hswish_ref_jnp(flat[n_main:])
        return jnp.concatenate([head, tail]).reshape(shape)

    rows = n // lane
    block_rows = _pick_block_rows(rows, lane, x.dtype.itemsize)
    out = _hswish_2d(x.reshape(rows, lane), block_rows, inplace)
    return out.reshape(shape)


def forward(x):
    """Matches PyTorch h_swish.forward (the inplace flag has no numeric effect)."""
    return h_swish(x)


if __name__ == "__main__":
    key = jax.random.PRNGKey(0)
    # Small shape consistent with the module's typical activation input (NCHW).
    x = jax.random.normal(key, (2, 4, 16, 16), jnp.float32) * 4.0

    fwd = jax.jit(forward)
    out = jax.block_until_ready(fwd(x))

    # Pure-JAX reference check.
    ref = x * jnp.clip(x + 3.0, 0.0, 6.0) / 6.0
    assert out.shape == x.shape, out.shape
    assert out.dtype == x.dtype, out.dtype
    assert bool(jnp.all(jnp.isfinite(out)))
    err = float(jnp.max(jnp.abs(out - ref)))
    assert err < 1e-5, err

    print("KERNEL_OK")
</pallas_src>

<mosaic_0001>
module attributes {stable_mosaic.version = 11 : i64} {
  func.func @_hswish_kernel(%arg0: i32, %arg1: memref<4x512xf32, #tpu.memory_space<vmem>>, %arg2: memref<4x512xf32, #tpu.memory_space<vmem>>) attributes {dimension_semantics = [#tpu.dimension_semantics<parallel>], iteration_bounds = array<i64: 1>, scalar_prefetch = 0 : i64, scratch_operands = 0 : i64, tpu.core_type = #tpu.core_type<tc>, window_params = [{transform_indices = @transform_0, window_bounds = array<i64: 4, 512>}, {transform_indices = @transform_1, window_bounds = array<i64: 4, 512>}]} {
    %c0 = arith.constant 0 : index
    %c0_0 = arith.constant 0 : index
    %0 = vector.load %arg1[%c0, %c0_0] : memref<4x512xf32, #tpu.memory_space<vmem>>, vector<4x512xf32>
    %cst = arith.constant 3.000000e+00 : f32
    %1 = vector.broadcast %cst : f32 to vector<4x512xf32>
    %2 = arith.addf %0, %1 : vector<4x512xf32>
    %cst_1 = arith.constant 0.000000e+00 : f32
    %cst_2 = arith.constant 6.000000e+00 : f32
    %3 = vector.broadcast %cst_1 : f32 to vector<4x512xf32>
    %4 = arith.maximumf %3, %2 : vector<4x512xf32>
    %5 = vector.broadcast %cst_2 : f32 to vector<4x512xf32>
    %6 = arith.minimumf %5, %4 : vector<4x512xf32>
    %7 = arith.mulf %0, %6 : vector<4x512xf32>
    %cst_3 = arith.constant 0.166666672 : f32
    %8 = vector.broadcast %cst_3 : f32 to vector<4x512xf32>
    %9 = arith.mulf %7, %8 : vector<4x512xf32>
    %c0_4 = arith.constant 0 : index
    %c0_5 = arith.constant 0 : index
    %10 = vector.load %arg2[%c0_4, %c0_5] : memref<4x512xf32, #tpu.memory_space<vmem>>, vector<4x512xf32>
    tpu.vector_store %arg2[%c0_4, %c0_5], %9 {strides = array<i32>} : memref<4x512xf32, #tpu.memory_space<vmem>>, vector<4x512xf32>,
    return
  }
  func.func @transform_0(%arg0: i32) -> (i32, i32) {
    %c0_i32 = arith.constant 0 : i32
    %c0_i32_0 = arith.constant 0 : i32
    return %arg0, %c0_i32 : i32, i32
  }
  func.func @transform_1(%arg0: i32) -> (i32, i32) {
    %c0_i32 = arith.constant 0 : i32
    %c0_i32_0 = arith.constant 0 : i32
    return %arg0, %c0_i32 : i32, i32
  }
}

</mosaic_0001>

<llo_original>
// kernel: forward.1
$region0: #{forward.1}
  #allocation0 [shape = 'u32[]', space=smem, size = 0x4, offset = 0x4, fixed_abs, tag = 'smem constant byte address 0x4 - core index']
  #allocation1 [shape = 'u32[144,128]{1,0:T(1,128)}', space=vmem, size = 0x12000, scoped, tag = 'internal scratch']
  %s0 = inlined_call_operand.vmem [shape: f32[4,512], index: 0, kind: input, shape index: {}]
  %s1 = inlined_call_operand.vmem [shape: f32[4,512], index: 1, kind: output, shape index: {}]
  %s2 = sld [smem:[#allocation0]]
  $region14: #{forward.1} parent=0
    _
  %s4 = ssub.s32 1, %s2
  %s5 = scalar_select 0, %s4, %s2
  // Predicated region
  $region2: #{forward.1} parent=0 // pred_check
    _
  $region3: #{forward.1} parent=0 // pred_check_branch
    %7 = sbr.rel (0) target = $region5
  $region4: #{forward.1} parent=0 // pred_region
    _
  $region5: #{forward.1} parent=0 // pred_fallthru
    _
  %v8 = vld [vmem:[%s0] sm:$0xff]
  %v9 = vld [vmem:[%s0 + $0x8] sm:$0xff]
  %v10 = vadd.f32 %v8, 3.0
  %v11 = vadd.f32 %v9, 3.0
  %v12 = vmax.f32 %v10, 0.0
  %v13 = vmax.f32 %v11, 0.0
  %v14 = vmin.f32 %v12, 6.0
  %v15 = vmin.f32 %v13, 6.0
  %v16 = vmul.f32 %v8, %v14
  %v17 = vmul.f32 %v9, %v15
  %v18 = vmul.f32 %v16, 0.16666667
  %v19 = vmul.f32 %v17, 0.16666667
  %20 = vst [vmem:[%s1] sm:$0xff] %v18
  %21 = vst [vmem:[%s1 + $0x8] sm:$0xff] %v19
  // Predicated region
  $region6: #{forward.1} parent=0 // pred_check
    _
  $region7: #{forward.1} parent=0 // pred_check_branch
    %23 = sbr.rel (0) target = $region9
  $region8: #{forward.1} parent=0 // pred_region
    _
  $region9: #{forward.1} parent=0 // pred_fallthru
    _
  // Predicated region
  $region10: #{forward.1} parent=0 // pred_check
    _
  $region11: #{forward.1} parent=0 // pred_check_branch
    %25 = sbr.rel (0) target = $region13
  $region12: #{forward.1} parent=0 // pred_region
    _
  $region13: #{forward.1} parent=0 // pred_fallthru
    _

</llo_original>
